<compile_context>
chip_gen: v7x
topology: tpu7x:2x2x1
jax: 0.10.0
libtpu: 0.0.40
codegen_flags: <defaults>
</compile_context>

<pallas_src>
import numpy as np
import jax
import jax.numpy as jnp
from jax import lax
from jax.experimental import pallas as pl
from jax.experimental.pallas import tpu as pltpu


KERNEL_MUL = 2.0
KERNEL_NUM = 5


def _update_index_matrix(batch_size: int, linear: bool = False) -> np.ndarray:
    """NumPy port of tllib.alignment.jan._update_index_matrix (trace-time constant)."""
    n = 2 * batch_size
    m = np.zeros((n, n), dtype=np.float32)
    if linear:
        for i in range(batch_size):
            s1, s2 = i, (i + 1) % batch_size
            t1, t2 = s1 + batch_size, s2 + batch_size
            m[s1, s2] = 1.0 / batch_size
            m[t1, t2] = 1.0 / batch_size
            m[s1, t2] = -1.0 / batch_size
            m[s2, t1] = -1.0 / batch_size
    else:
        for i in range(batch_size):
            for j in range(batch_size):
                if i != j:
                    m[i, j] = 1.0 / (batch_size * (batch_size - 1))
                    m[i + batch_size, j + batch_size] = 1.0 / (batch_size * (batch_size - 1))
        for i in range(batch_size):
            for j in range(batch_size):
                m[i, j + batch_size] = -1.0 / (batch_size * batch_size)
                m[i + batch_size, j] = -1.0 / (batch_size * batch_size)
    return m


def _gram_xxt(total):
    """total @ total^T with f32 accumulation on the MXU, no operand transpose."""
    dn = (((1,), (1,)), ((), ()))
    if total.dtype == jnp.float32:
        # Precision.HIGH-equivalent (bf16_3x) done manually: split f32 into hi+lo
        # bf16 halves and keep the three significant cross terms.  3 single-pass
        # bf16 matmuls instead of the 6-pass HIGHEST decomposition; the dropped
        # lo*lo term is ~2^-18 relative.
        hi = total.astype(jnp.bfloat16)
        lo = (total - hi.astype(jnp.float32)).astype(jnp.bfloat16)
        g = lax.dot_general(hi, hi, dn, preferred_element_type=jnp.float32)
        g = g + lax.dot_general(hi, lo, dn, preferred_element_type=jnp.float32)
        g = g + lax.dot_general(lo, hi, dn, preferred_element_type=jnp.float32)
        return g
    # bf16 (or other narrow) activations: single MXU pass, accumulate in f32.
    return lax.dot_general(total, total, dn, preferred_element_type=jnp.float32)


def _make_jmmd_kernel(num_layers: int, batch_size: int, dims, n_buf: int):
    n = 2 * batch_size
    inv_denom = 1.0 / (float(n * n - n) * float(KERNEL_MUL ** (KERNEL_NUM // 2)))

    def kernel(*refs):
        s_refs = refs[:num_layers]                       # HBM (pl.ANY) refs, (B, D_l)
        t_refs = refs[num_layers:2 * num_layers]         # HBM (pl.ANY) refs, (B, D_l)
        index_ref = refs[2 * num_layers]                 # VMEM (n, n) f32
        o_ref = refs[2 * num_layers + 1]                 # VMEM (1, 1) f32
        bufs = refs[2 * num_layers + 2:2 * num_layers + 2 + n_buf]   # concat scratch
        sem = refs[2 * num_layers + 2 + n_buf]           # DMA sems (n_buf, 2)

        def layer_copies(l, slot):
            d = dims[l]
            dst = bufs[slot]
            c_s = pltpu.make_async_copy(
                s_refs[l], dst.at[pl.ds(0, batch_size), pl.ds(0, d)], sem.at[slot, 0])
            c_t = pltpu.make_async_copy(
                t_refs[l], dst.at[pl.ds(batch_size, batch_size), pl.ds(0, d)],
                sem.at[slot, 1])
            return c_s, c_t

        # Prime the pipeline: start layer 0's activation DMAs (HBM -> scratch halves).
        c_s, c_t = layer_copies(0, 0)
        c_s.start()
        c_t.start()

        # Diagonal mask, built once (2-D iota is TPU-legal).
        rows = lax.broadcasted_iota(jnp.int32, (n, n), 0)
        cols = lax.broadcasted_iota(jnp.int32, (n, n), 1)
        diag_mask = rows == cols

        kernel_matrix = None
        for l in range(num_layers):
            slot = l % n_buf
            d = dims[l]

            # Wait for this layer's activations ...
            c_s, c_t = layer_copies(l, slot)
            c_s.wait()
            c_t.wait()
            # ... and immediately prefetch the next layer into the other slot so its
            # HBM traffic overlaps this layer's Gram/exp compute.
            if l + 1 < num_layers:
                p_s, p_t = layer_copies(l + 1, (l + 1) % n_buf)
                p_s.start()
                p_t.start()

            total = bufs[slot][:, pl.ds(0, d)]           # (n, d) == [z_s^l ; z_t^l]
            g = _gram_xxt(total)                         # (n, n) f32 Gram

            # Squared norms = diag(G) as column / row vectors via mask + reductions
            # (no transpose).  Using diag(G) keeps diag(L2) exactly zero.
            g_diag = jnp.where(diag_mask, g, 0.0)
            sq_row = jnp.sum(g_diag, axis=0, keepdims=True)     # (1, n)
            sq_col = jnp.sum(g_diag, axis=1, keepdims=True)     # (n, 1)
            # Clamp: Gram-expansion cancellation can give tiny negative values.
            l2 = jnp.maximum(sq_col + sq_row - 2.0 * g, 0.0)    # (n, n)

            # Data-dependent bandwidth (fix_sigma=None path of guassian_kernel).
            l2_sum = jnp.sum(jnp.sum(l2, axis=1, keepdims=True),
                             axis=0, keepdims=True)             # (1, 1)
            bandwidth = jnp.maximum(l2_sum * inv_denom, 1e-30)  # floor -> no inf/NaN
            # One exact scalar reciprocal per layer; kernel_mul^i and the minus sign
            # are folded into (1,1) scalars so the exp loop is one VPU multiply +
            # one EUP exp per element (no n^2 divides).
            inv_bw = 1.0 / bandwidth                            # (1, 1)

            layer_k = None
            for i in range(KERNEL_NUM):
                neg_inv_i = inv_bw * float(-1.0 / (KERNEL_MUL ** i))   # (1, 1)
                e = jnp.exp(l2 * neg_inv_i)
                layer_k = e if layer_k is None else layer_k + e

            kernel_matrix = layer_k if kernel_matrix is None else kernel_matrix * layer_k

        weighted = kernel_matrix * index_ref[...]
        loss = jnp.sum(jnp.sum(weighted, axis=1, keepdims=True),
                       axis=0, keepdims=True)                   # (1, 1)
        o_ref[...] = loss + 2.0 / float(batch_size - 1)

    return kernel


def jmmd_loss(z_s, z_t, linear: bool = False) -> jax.Array:
    """JMMD forward loss. z_s, z_t: tuples of [B, D_l] arrays (same shape/dtype per layer)."""
    z_s, z_t = tuple(z_s), tuple(z_t)
    assert len(z_s) == len(z_t) and len(z_s) >= 1
    num_layers = len(z_s)
    batch_size = int(z_s[0].shape[0])
    n = 2 * batch_size
    dtype = z_s[0].dtype
    dims = tuple(int(z.shape[1]) for z in z_s)
    for zs, zt, d in zip(z_s, z_t, dims):
        assert zs.ndim == 2 and zt.ndim == 2
        assert zs.shape == (batch_size, d) and zt.shape == (batch_size, d)
        assert zs.dtype == dtype and zt.dtype == dtype

    # The target-half DMA lands at row offset B of the concat scratch; keep it
    # sublane-tile aligned for the activation dtype (8 rows for f32, 16 for bf16).
    row_align = max(8, 32 // jnp.dtype(dtype).itemsize)
    assert batch_size % row_align == 0, (
        f"batch_size ({batch_size}) must be a multiple of {row_align} for dtype {dtype}")
    assert batch_size > 1

    max_d = max(dims)
    n_buf = 2 if num_layers > 1 else 1

    index_matrix = jnp.asarray(_update_index_matrix(batch_size, linear), jnp.float32)

    feats = list(z_s) + list(z_t)
    # Activations stay in HBM (manual DMA); only the small index matrix is auto-DMA'd.
    in_specs = [pl.BlockSpec(memory_space=pl.ANY) for _ in feats]
    in_specs.append(pl.BlockSpec((n, n), lambda i: (0, 0)))

    # Explicit VMEM budget: concat scratch slots + index matrix + a handful of (n,n)
    # f32 temporaries.  Capped at 48 MiB so the same config also fits v7x (64 MiB
    # physical VMEM); defaults are only 16/32 MiB scoped on v5e / v6e+.
    itemsize = jnp.dtype(dtype).itemsize
    vmem_est = n_buf * n * max_d * itemsize + n * n * 4 * 10 + (2 << 20)
    vmem_limit = int(min(max(vmem_est, 16 << 20), 48 << 20))

    out = pl.pallas_call(
        _make_jmmd_kernel(num_layers, batch_size, dims, n_buf),
        out_shape=jax.ShapeDtypeStruct((1, 1), jnp.float32),
        grid=(1,),
        in_specs=in_specs,
        out_specs=pl.BlockSpec((1, 1), lambda i: (0, 0)),
        scratch_shapes=[pltpu.VMEM((n, max_d), dtype) for _ in range(n_buf)]
                       + [pltpu.SemaphoreType.DMA((n_buf, 2))],
        compiler_params=pltpu.CompilerParams(
            dimension_semantics=("arbitrary",),
            vmem_limit_bytes=vmem_limit,
        ),
    )(*feats, index_matrix)
    return out[0, 0]


# ----------------------- pure-JAX reference (torch semantics) -----------------------

def _gaussian_kernel_ref(source, target, kernel_mul=KERNEL_MUL, kernel_num=KERNEL_NUM,
                         fix_sigma=None):
    n_samples = source.shape[0] + target.shape[0]
    total = jnp.concatenate([source, target], axis=0)
    total0 = total[None, :, :]
    total1 = total[:, None, :]
    l2 = jnp.sum((total0 - total1) ** 2, axis=2)
    if fix_sigma is not None:
        bandwidth = fix_sigma
    else:
        bandwidth = jnp.sum(l2) / (n_samples ** 2 - n_samples)
    bandwidth = bandwidth / (kernel_mul ** (kernel_num // 2))
    vals = [jnp.exp(-l2 / (bandwidth * (kernel_mul ** i))) for i in range(kernel_num)]
    return sum(vals)


def jmmd_ref(z_s, z_t, linear: bool = False):
    batch_size = z_s[0].shape[0]
    index_matrix = jnp.asarray(_update_index_matrix(batch_size, linear), jnp.float32)
    kernel_matrix = jnp.ones_like(index_matrix)
    for ls, lt in zip(z_s, z_t):
        kernel_matrix = kernel_matrix * _gaussian_kernel_ref(ls, lt)
    return jnp.sum(kernel_matrix * index_matrix) + 2.0 / float(batch_size - 1)


if __name__ == "__main__":
    batch = 8                  # B source + B target -> n = 16 rows (sublane aligned)
    feature_dims = (128, 256)  # two "layers", lane-dense feature dims

    key = jax.random.PRNGKey(0)
    keys = jax.random.split(key, 2 * len(feature_dims))
    z_s = tuple(jax.random.normal(keys[2 * l], (batch, d), jnp.float32)
                for l, d in enumerate(feature_dims))
    z_t = tuple(jax.random.normal(keys[2 * l + 1], (batch, d), jnp.float32)
                for l, d in enumerate(feature_dims))

    loss = jmmd_loss(z_s, z_t, linear=False)
    loss = jax.block_until_ready(loss)

    ref = jmmd_ref(z_s, z_t, linear=False)
    ref = jax.block_until_ready(ref)
    assert loss.shape == ()
    assert bool(jnp.isfinite(loss)), float(loss)
    assert jnp.allclose(loss, ref, atol=1e-3, rtol=1e-3), (float(loss), float(ref))

    print("KERNEL_OK")
</pallas_src>

<mosaic_0001>
module attributes {stable_mosaic.version = 11 : i64} {
  func.func @kernel(%arg0: i32, %arg1: memref<8x128xf32, #tpu.memory_space<any>>, %arg2: memref<8x256xf32, #tpu.memory_space<any>>, %arg3: memref<8x128xf32, #tpu.memory_space<any>>, %arg4: memref<8x256xf32, #tpu.memory_space<any>>, %arg5: memref<16x16xf32, #tpu.memory_space<vmem>>, %arg6: memref<1x1xf32, #tpu.memory_space<vmem>>, %arg7: memref<16x256xf32, #tpu.memory_space<vmem>>, %arg8: memref<16x256xf32, #tpu.memory_space<vmem>>, %arg9: memref<2x2x!tpu.dma_semaphore, #tpu.memory_space<semaphore_mem>>) attributes {dimension_semantics = [#tpu.dimension_semantics<arbitrary>], iteration_bounds = array<i64: 1>, scalar_prefetch = 0 : i64, scratch_operands = 3 : i64, tpu.core_type = #tpu.core_type<tc>, window_params = [{}, {}, {}, {}, {pipeline_mode = #tpu.pipeline_mode<synchronous>, transform_indices = @transform_4, window_bounds = array<i64: 16, 16>}, {pipeline_mode = #tpu.pipeline_mode<synchronous>, transform_indices = @transform_5, window_bounds = array<i64: 1, 1>}]} {
    %c0_i32 = arith.constant 0 : i32
    %c0_i32_0 = arith.constant 0 : i32
    %c0_i32_1 = arith.constant 0 : i32
    %c0_i32_2 = arith.constant 0 : i32
    %0 = tpu.memref_slice %arg7[%c0_i32_1, %c0_i32_2] : memref<16x256xf32, #tpu.memory_space<vmem>> -> memref<8x128xf32, #tpu.memory_space<vmem>>
    %1 = tpu.memref_slice %arg9[%c0_i32, %c0_i32_0] : memref<2x2x!tpu.dma_semaphore, #tpu.memory_space<semaphore_mem>> -> memref<1x1x!tpu.dma_semaphore, #tpu.memory_space<semaphore_mem>>
    %2 = tpu.memref_squeeze %1 : memref<1x1x!tpu.dma_semaphore, #tpu.memory_space<semaphore_mem>> -> memref<!tpu.dma_semaphore, #tpu.memory_space<semaphore_mem>>
    tpu.enqueue_dma source(%arg1 : memref<8x128xf32, #tpu.memory_space<any>>) target(%0 : memref<8x128xf32, #tpu.memory_space<vmem>>) target_semaphore(%2 : memref<!tpu.dma_semaphore, #tpu.memory_space<semaphore_mem>>)
    %c0_i32_3 = arith.constant 0 : i32
    %c1_i32 = arith.constant 1 : i32
    %c8_i32 = arith.constant 8 : i32
    %c0_i32_4 = arith.constant 0 : i32
    %3 = tpu.memref_slice %arg7[%c8_i32, %c0_i32_4] : memref<16x256xf32, #tpu.memory_space<vmem>> -> memref<8x128xf32, #tpu.memory_space<vmem>>
    %4 = tpu.memref_slice %arg9[%c0_i32_3, %c1_i32] : memref<2x2x!tpu.dma_semaphore, #tpu.memory_space<semaphore_mem>> -> memref<1x1x!tpu.dma_semaphore, #tpu.memory_space<semaphore_mem>>
    %5 = tpu.memref_squeeze %4 : memref<1x1x!tpu.dma_semaphore, #tpu.memory_space<semaphore_mem>> -> memref<!tpu.dma_semaphore, #tpu.memory_space<semaphore_mem>>
    tpu.enqueue_dma source(%arg3 : memref<8x128xf32, #tpu.memory_space<any>>) target(%3 : memref<8x128xf32, #tpu.memory_space<vmem>>) target_semaphore(%5 : memref<!tpu.dma_semaphore, #tpu.memory_space<semaphore_mem>>)
    %6 = tpu.iota {dimensions = array<i32: 0>} : vector<16x16xi32>
    %7 = tpu.iota {dimensions = array<i32: 1>} : vector<16x16xi32>
    %8 = arith.cmpi eq, %6, %7 : vector<16x16xi32>
    %c0_i32_5 = arith.constant 0 : i32
    %c0_i32_6 = arith.constant 0 : i32
    %c0_i32_7 = arith.constant 0 : i32
    %c0_i32_8 = arith.constant 0 : i32
    %9 = tpu.memref_slice %arg7[%c0_i32_7, %c0_i32_8] : memref<16x256xf32, #tpu.memory_space<vmem>> -> memref<8x128xf32, #tpu.memory_space<vmem>>
    %10 = tpu.memref_slice %arg9[%c0_i32_5, %c0_i32_6] : memref<2x2x!tpu.dma_semaphore, #tpu.memory_space<semaphore_mem>> -> memref<1x1x!tpu.dma_semaphore, #tpu.memory_space<semaphore_mem>>
    %11 = tpu.memref_squeeze %10 : memref<1x1x!tpu.dma_semaphore, #tpu.memory_space<semaphore_mem>> -> memref<!tpu.dma_semaphore, #tpu.memory_space<semaphore_mem>>
    tpu.wait_dma2 semaphore(%11 : memref<!tpu.dma_semaphore, #tpu.memory_space<semaphore_mem>>) src(%arg1 : memref<8x128xf32, #tpu.memory_space<any>>) dst(%9 : memref<8x128xf32, #tpu.memory_space<vmem>>)
    %c0_i32_9 = arith.constant 0 : i32
    %c1_i32_10 = arith.constant 1 : i32
    %c8_i32_11 = arith.constant 8 : i32
    %c0_i32_12 = arith.constant 0 : i32
    %12 = tpu.memref_slice %arg7[%c8_i32_11, %c0_i32_12] : memref<16x256xf32, #tpu.memory_space<vmem>> -> memref<8x128xf32, #tpu.memory_space<vmem>>
    %13 = tpu.memref_slice %arg9[%c0_i32_9, %c1_i32_10] : memref<2x2x!tpu.dma_semaphore, #tpu.memory_space<semaphore_mem>> -> memref<1x1x!tpu.dma_semaphore, #tpu.memory_space<semaphore_mem>>
    %14 = tpu.memref_squeeze %13 : memref<1x1x!tpu.dma_semaphore, #tpu.memory_space<semaphore_mem>> -> memref<!tpu.dma_semaphore, #tpu.memory_space<semaphore_mem>>
    tpu.wait_dma2 semaphore(%14 : memref<!tpu.dma_semaphore, #tpu.memory_space<semaphore_mem>>) src(%arg3 : memref<8x128xf32, #tpu.memory_space<any>>) dst(%12 : memref<8x128xf32, #tpu.memory_space<vmem>>)
    %c1_i32_13 = arith.constant 1 : i32
    %c0_i32_14 = arith.constant 0 : i32
    %c0_i32_15 = arith.constant 0 : i32
    %c0_i32_16 = arith.constant 0 : i32
    %15 = tpu.memref_slice %arg8[%c0_i32_15, %c0_i32_16] : memref<16x256xf32, #tpu.memory_space<vmem>> -> memref<8x256xf32, #tpu.memory_space<vmem>>
    %16 = tpu.memref_slice %arg9[%c1_i32_13, %c0_i32_14] : memref<2x2x!tpu.dma_semaphore, #tpu.memory_space<semaphore_mem>> -> memref<1x1x!tpu.dma_semaphore, #tpu.memory_space<semaphore_mem>>
    %17 = tpu.memref_squeeze %16 : memref<1x1x!tpu.dma_semaphore, #tpu.memory_space<semaphore_mem>> -> memref<!tpu.dma_semaphore, #tpu.memory_space<semaphore_mem>>
    tpu.enqueue_dma source(%arg2 : memref<8x256xf32, #tpu.memory_space<any>>) target(%15 : memref<8x256xf32, #tpu.memory_space<vmem>>) target_semaphore(%17 : memref<!tpu.dma_semaphore, #tpu.memory_space<semaphore_mem>>)
    %c1_i32_17 = arith.constant 1 : i32
    %c1_i32_18 = arith.constant 1 : i32
    %c8_i32_19 = arith.constant 8 : i32
    %c0_i32_20 = arith.constant 0 : i32
    %18 = tpu.memref_slice %arg8[%c8_i32_19, %c0_i32_20] : memref<16x256xf32, #tpu.memory_space<vmem>> -> memref<8x256xf32, #tpu.memory_space<vmem>>
    %19 = tpu.memref_slice %arg9[%c1_i32_17, %c1_i32_18] : memref<2x2x!tpu.dma_semaphore, #tpu.memory_space<semaphore_mem>> -> memref<1x1x!tpu.dma_semaphore, #tpu.memory_space<semaphore_mem>>
    %20 = tpu.memref_squeeze %19 : memref<1x1x!tpu.dma_semaphore, #tpu.memory_space<semaphore_mem>> -> memref<!tpu.dma_semaphore, #tpu.memory_space<semaphore_mem>>
    tpu.enqueue_dma source(%arg4 : memref<8x256xf32, #tpu.memory_space<any>>) target(%18 : memref<8x256xf32, #tpu.memory_space<vmem>>) target_semaphore(%20 : memref<!tpu.dma_semaphore, #tpu.memory_space<semaphore_mem>>)
    %c0 = arith.constant 0 : index
    %c0_21 = arith.constant 0 : index
    %21 = vector.load %arg7[%c0, %c0_21] : memref<16x256xf32, #tpu.memory_space<vmem>>, vector<16x128xf32>
    %22 = arith.truncf %21 : vector<16x128xf32> to vector<16x128xbf16>
    %23 = arith.extf %22 : vector<16x128xbf16> to vector<16x128xf32>
    %24 = arith.subf %21, %23 : vector<16x128xf32>
    %25 = arith.truncf %24 : vector<16x128xf32> to vector<16x128xbf16>
    %cst = arith.constant dense<0.000000e+00> : vector<16x16xf32>
    %26 = tpu.matmul %22, %22, %cst {dimension_numbers = #tpu.dot_dimension_numbers<[1], [1], [0], [0], [0, 0, 1, 0], [], []>} : vector<16x128xbf16>, vector<16x128xbf16>, vector<16x16xf32> -> vector<16x16xf32>
    %cst_22 = arith.constant dense<0.000000e+00> : vector<16x16xf32>
    %27 = tpu.matmul %22, %25, %cst_22 {dimension_numbers = #tpu.dot_dimension_numbers<[1], [1], [0], [0], [0, 0, 1, 0], [], []>} : vector<16x128xbf16>, vector<16x128xbf16>, vector<16x16xf32> -> vector<16x16xf32>
    %28 = arith.addf %26, %27 : vector<16x16xf32>
    %cst_23 = arith.constant dense<0.000000e+00> : vector<16x16xf32>
    %29 = tpu.matmul %25, %22, %cst_23 {dimension_numbers = #tpu.dot_dimension_numbers<[1], [1], [0], [0], [0, 0, 1, 0], [], []>} : vector<16x128xbf16>, vector<16x128xbf16>, vector<16x16xf32> -> vector<16x16xf32>
    %30 = arith.addf %28, %29 : vector<16x16xf32>
    %cst_24 = arith.constant 0.000000e+00 : f32
    %31 = vector.broadcast %cst_24 : f32 to vector<16x16xf32>
    %32 = arith.select %8, %30, %31 : vector<16x16xi1>, vector<16x16xf32>
    %cst_25 = arith.constant dense<0.000000e+00> : vector<16xf32>
    %33 = vector.multi_reduction <add>, %32, %cst_25 [0] : vector<16x16xf32> to vector<16xf32>
    %34 = vector.shape_cast %33 : vector<16xf32> to vector<1x16xf32>
    %cst_26 = arith.constant dense<0.000000e+00> : vector<16xf32>
    %35 = vector.multi_reduction <add>, %32, %cst_26 [1] : vector<16x16xf32> to vector<16xf32>
    %36 = vector.shape_cast %35 : vector<16xf32> to vector<16x1xf32>
    %37 = vector.broadcast %36 : vector<16x1xf32> to vector<16x16xf32>
    %38 = vector.broadcast %34 : vector<1x16xf32> to vector<16x16xf32>
    %39 = arith.addf %37, %38 : vector<16x16xf32>
    %cst_27 = arith.constant 2.000000e+00 : f32
    %40 = vector.broadcast %cst_27 : f32 to vector<16x16xf32>
    %41 = arith.mulf %40, %30 : vector<16x16xf32>
    %42 = arith.subf %39, %41 : vector<16x16xf32>
    %cst_28 = arith.constant 0.000000e+00 : f32
    %43 = vector.broadcast %cst_28 : f32 to vector<16x16xf32>
    %44 = arith.maximumf %42, %43 : vector<16x16xf32>
    %cst_29 = arith.constant dense<0.000000e+00> : vector<16xf32>
    %45 = vector.multi_reduction <add>, %44, %cst_29 [1] : vector<16x16xf32> to vector<16xf32>
    %46 = vector.shape_cast %45 : vector<16xf32> to vector<16x1xf32>
    %cst_30 = arith.constant dense<0.000000e+00> : vector<1xf32>
    %47 = vector.multi_reduction <add>, %46, %cst_30 [0] : vector<16x1xf32> to vector<1xf32>
    %48 = vector.shape_cast %47 : vector<1xf32> to vector<1x1xf32>
    %cst_31 = arith.constant 0.00104166672 : f32
    %49 = vector.broadcast %cst_31 : f32 to vector<1x1xf32>
    %50 = arith.mulf %48, %49 : vector<1x1xf32>
    %cst_32 = arith.constant 1.000000e-30 : f32
    %51 = vector.broadcast %cst_32 : f32 to vector<1x1xf32>
    %52 = arith.maximumf %50, %51 : vector<1x1xf32>
    %cst_33 = arith.constant 1.000000e+00 : f32
    %53 = vector.broadcast %cst_33 : f32 to vector<1x1xf32>
    %54 = arith.divf %53, %52 : vector<1x1xf32>
    %cst_34 = arith.constant -1.000000e+00 : f32
    %55 = vector.broadcast %cst_34 : f32 to vector<1x1xf32>
    %56 = arith.mulf %54, %55 : vector<1x1xf32>
    %57 = vector.broadcast %56 : vector<1x1xf32> to vector<16x16xf32>
    %58 = arith.mulf %44, %57 : vector<16x16xf32>
    %59 = math.exp %58 : vector<16x16xf32>
    %cst_35 = arith.constant -5.000000e-01 : f32
    %60 = vector.broadcast %cst_35 : f32 to vector<1x1xf32>
    %61 = arith.mulf %54, %60 : vector<1x1xf32>
    %62 = vector.broadcast %61 : vector<1x1xf32> to vector<16x16xf32>
    %63 = arith.mulf %44, %62 : vector<16x16xf32>
    %64 = math.exp %63 : vector<16x16xf32>
    %65 = arith.addf %59, %64 : vector<16x16xf32>
    %cst_36 = arith.constant -2.500000e-01 : f32
    %66 = vector.broadcast %cst_36 : f32 to vector<1x1xf32>
    %67 = arith.mulf %54, %66 : vector<1x1xf32>
    %68 = vector.broadcast %67 : vector<1x1xf32> to vector<16x16xf32>
    %69 = arith.mulf %44, %68 : vector<16x16xf32>
    %70 = math.exp %69 : vector<16x16xf32>
    %71 = arith.addf %65, %70 : vector<16x16xf32>
    %cst_37 = arith.constant -1.250000e-01 : f32
    %72 = vector.broadcast %cst_37 : f32 to vector<1x1xf32>
    %73 = arith.mulf %54, %72 : vector<1x1xf32>
    %74 = vector.broadcast %73 : vector<1x1xf32> to vector<16x16xf32>
    %75 = arith.mulf %44, %74 : vector<16x16xf32>
    %76 = math.exp %75 : vector<16x16xf32>
    %77 = arith.addf %71, %76 : vector<16x16xf32>
    %cst_38 = arith.constant -6.250000e-02 : f32
    %78 = vector.broadcast %cst_38 : f32 to vector<1x1xf32>
    %79 = arith.mulf %54, %78 : vector<1x1xf32>
    %80 = vector.broadcast %79 : vector<1x1xf32> to vector<16x16xf32>
    %81 = arith.mulf %44, %80 : vector<16x16xf32>
    %82 = math.exp %81 : vector<16x16xf32>
    %83 = arith.addf %77, %82 : vector<16x16xf32>
    %c1_i32_39 = arith.constant 1 : i32
    %c0_i32_40 = arith.constant 0 : i32
    %c0_i32_41 = arith.constant 0 : i32
    %c0_i32_42 = arith.constant 0 : i32
    %84 = tpu.memref_slice %arg8[%c0_i32_41, %c0_i32_42] : memref<16x256xf32, #tpu.memory_space<vmem>> -> memref<8x256xf32, #tpu.memory_space<vmem>>
    %85 = tpu.memref_slice %arg9[%c1_i32_39, %c0_i32_40] : memref<2x2x!tpu.dma_semaphore, #tpu.memory_space<semaphore_mem>> -> memref<1x1x!tpu.dma_semaphore, #tpu.memory_space<semaphore_mem>>
    %86 = tpu.memref_squeeze %85 : memref<1x1x!tpu.dma_semaphore, #tpu.memory_space<semaphore_mem>> -> memref<!tpu.dma_semaphore, #tpu.memory_space<semaphore_mem>>
    tpu.wait_dma2 semaphore(%86 : memref<!tpu.dma_semaphore, #tpu.memory_space<semaphore_mem>>) src(%arg2 : memref<8x256xf32, #tpu.memory_space<any>>) dst(%84 : memref<8x256xf32, #tpu.memory_space<vmem>>)
    %c1_i32_43 = arith.constant 1 : i32
    %c1_i32_44 = arith.constant 1 : i32
    %c8_i32_45 = arith.constant 8 : i32
    %c0_i32_46 = arith.constant 0 : i32
    %87 = tpu.memref_slice %arg8[%c8_i32_45, %c0_i32_46] : memref<16x256xf32, #tpu.memory_space<vmem>> -> memref<8x256xf32, #tpu.memory_space<vmem>>
    %88 = tpu.memref_slice %arg9[%c1_i32_43, %c1_i32_44] : memref<2x2x!tpu.dma_semaphore, #tpu.memory_space<semaphore_mem>> -> memref<1x1x!tpu.dma_semaphore, #tpu.memory_space<semaphore_mem>>
    %89 = tpu.memref_squeeze %88 : memref<1x1x!tpu.dma_semaphore, #tpu.memory_space<semaphore_mem>> -> memref<!tpu.dma_semaphore, #tpu.memory_space<semaphore_mem>>
    tpu.wait_dma2 semaphore(%89 : memref<!tpu.dma_semaphore, #tpu.memory_space<semaphore_mem>>) src(%arg4 : memref<8x256xf32, #tpu.memory_space<any>>) dst(%87 : memref<8x256xf32, #tpu.memory_space<vmem>>)
    %c0_47 = arith.constant 0 : index
    %c0_48 = arith.constant 0 : index
    %90 = vector.load %arg8[%c0_47, %c0_48] : memref<16x256xf32, #tpu.memory_space<vmem>>, vector<16x256xf32>
    %91 = arith.truncf %90 : vector<16x256xf32> to vector<16x256xbf16>
    %92 = arith.extf %91 : vector<16x256xbf16> to vector<16x256xf32>
    %93 = arith.subf %90, %92 : vector<16x256xf32>
    %94 = arith.truncf %93 : vector<16x256xf32> to vector<16x256xbf16>
    %cst_49 = arith.constant dense<0.000000e+00> : vector<16x16xf32>
    %95 = tpu.matmul %91, %91, %cst_49 {dimension_numbers = #tpu.dot_dimension_numbers<[1], [1], [0], [0], [0, 0, 1, 0], [], []>} : vector<16x256xbf16>, vector<16x256xbf16>, vector<16x16xf32> -> vector<16x16xf32>
    %cst_50 = arith.constant dense<0.000000e+00> : vector<16x16xf32>
    %96 = tpu.matmul %91, %94, %cst_50 {dimension_numbers = #tpu.dot_dimension_numbers<[1], [1], [0], [0], [0, 0, 1, 0], [], []>} : vector<16x256xbf16>, vector<16x256xbf16>, vector<16x16xf32> -> vector<16x16xf32>
    %97 = arith.addf %95, %96 : vector<16x16xf32>
    %cst_51 = arith.constant dense<0.000000e+00> : vector<16x16xf32>
    %98 = tpu.matmul %94, %91, %cst_51 {dimension_numbers = #tpu.dot_dimension_numbers<[1], [1], [0], [0], [0, 0, 1, 0], [], []>} : vector<16x256xbf16>, vector<16x256xbf16>, vector<16x16xf32> -> vector<16x16xf32>
    %99 = arith.addf %97, %98 : vector<16x16xf32>
    %cst_52 = arith.constant 0.000000e+00 : f32
    %100 = vector.broadcast %cst_52 : f32 to vector<16x16xf32>
    %101 = arith.select %8, %99, %100 : vector<16x16xi1>, vector<16x16xf32>
    %cst_53 = arith.constant dense<0.000000e+00> : vector<16xf32>
    %102 = vector.multi_reduction <add>, %101, %cst_53 [0] : vector<16x16xf32> to vector<16xf32>
    %103 = vector.shape_cast %102 : vector<16xf32> to vector<1x16xf32>
    %cst_54 = arith.constant dense<0.000000e+00> : vector<16xf32>
    %104 = vector.multi_reduction <add>, %101, %cst_54 [1] : vector<16x16xf32> to vector<16xf32>
    %105 = vector.shape_cast %104 : vector<16xf32> to vector<16x1xf32>
    %106 = vector.broadcast %105 : vector<16x1xf32> to vector<16x16xf32>
    %107 = vector.broadcast %103 : vector<1x16xf32> to vector<16x16xf32>
    %108 = arith.addf %106, %107 : vector<16x16xf32>
    %cst_55 = arith.constant 2.000000e+00 : f32
    %109 = vector.broadcast %cst_55 : f32 to vector<16x16xf32>
    %110 = arith.mulf %109, %99 : vector<16x16xf32>
    %111 = arith.subf %108, %110 : vector<16x16xf32>
    %cst_56 = arith.constant 0.000000e+00 : f32
    %112 = vector.broadcast %cst_56 : f32 to vector<16x16xf32>
    %113 = arith.maximumf %111, %112 : vector<16x16xf32>
    %cst_57 = arith.constant dense<0.000000e+00> : vector<16xf32>
    %114 = vector.multi_reduction <add>, %113, %cst_57 [1] : vector<16x16xf32> to vector<16xf32>
    %115 = vector.shape_cast %114 : vector<16xf32> to vector<16x1xf32>
    %cst_58 = arith.constant dense<0.000000e+00> : vector<1xf32>
    %116 = vector.multi_reduction <add>, %115, %cst_58 [0] : vector<16x1xf32> to vector<1xf32>
    %117 = vector.shape_cast %116 : vector<1xf32> to vector<1x1xf32>
    %cst_59 = arith.constant 0.00104166672 : f32
    %118 = vector.broadcast %cst_59 : f32 to vector<1x1xf32>
    %119 = arith.mulf %117, %118 : vector<1x1xf32>
    %cst_60 = arith.constant 1.000000e-30 : f32
    %120 = vector.broadcast %cst_60 : f32 to vector<1x1xf32>
    %121 = arith.maximumf %119, %120 : vector<1x1xf32>
    %cst_61 = arith.constant 1.000000e+00 : f32
    %122 = vector.broadcast %cst_61 : f32 to vector<1x1xf32>
    %123 = arith.divf %122, %121 : vector<1x1xf32>
    %cst_62 = arith.constant -1.000000e+00 : f32
    %124 = vector.broadcast %cst_62 : f32 to vector<1x1xf32>
    %125 = arith.mulf %123, %124 : vector<1x1xf32>
    %126 = vector.broadcast %125 : vector<1x1xf32> to vector<16x16xf32>
    %127 = arith.mulf %113, %126 : vector<16x16xf32>
    %128 = math.exp %127 : vector<16x16xf32>
    %cst_63 = arith.constant -5.000000e-01 : f32
    %129 = vector.broadcast %cst_63 : f32 to vector<1x1xf32>
    %130 = arith.mulf %123, %129 : vector<1x1xf32>
    %131 = vector.broadcast %130 : vector<1x1xf32> to vector<16x16xf32>
    %132 = arith.mulf %113, %131 : vector<16x16xf32>
    %133 = math.exp %132 : vector<16x16xf32>
    %134 = arith.addf %128, %133 : vector<16x16xf32>
    %cst_64 = arith.constant -2.500000e-01 : f32
    %135 = vector.broadcast %cst_64 : f32 to vector<1x1xf32>
    %136 = arith.mulf %123, %135 : vector<1x1xf32>
    %137 = vector.broadcast %136 : vector<1x1xf32> to vector<16x16xf32>
    %138 = arith.mulf %113, %137 : vector<16x16xf32>
    %139 = math.exp %138 : vector<16x16xf32>
    %140 = arith.addf %134, %139 : vector<16x16xf32>
    %cst_65 = arith.constant -1.250000e-01 : f32
    %141 = vector.broadcast %cst_65 : f32 to vector<1x1xf32>
    %142 = arith.mulf %123, %141 : vector<1x1xf32>
    %143 = vector.broadcast %142 : vector<1x1xf32> to vector<16x16xf32>
    %144 = arith.mulf %113, %143 : vector<16x16xf32>
    %145 = math.exp %144 : vector<16x16xf32>
    %146 = arith.addf %140, %145 : vector<16x16xf32>
    %cst_66 = arith.constant -6.250000e-02 : f32
    %147 = vector.broadcast %cst_66 : f32 to vector<1x1xf32>
    %148 = arith.mulf %123, %147 : vector<1x1xf32>
    %149 = vector.broadcast %148 : vector<1x1xf32> to vector<16x16xf32>
    %150 = arith.mulf %113, %149 : vector<16x16xf32>
    %151 = math.exp %150 : vector<16x16xf32>
    %152 = arith.addf %146, %151 : vector<16x16xf32>
    %153 = arith.mulf %83, %152 : vector<16x16xf32>
    %c0_67 = arith.constant 0 : index
    %c0_68 = arith.constant 0 : index
    %154 = vector.load %arg5[%c0_67, %c0_68] : memref<16x16xf32, #tpu.memory_space<vmem>>, vector<16x16xf32>
    %155 = arith.mulf %153, %154 : vector<16x16xf32>
    %cst_69 = arith.constant dense<0.000000e+00> : vector<16xf32>
    %156 = vector.multi_reduction <add>, %155, %cst_69 [1] : vector<16x16xf32> to vector<16xf32>
    %157 = vector.shape_cast %156 : vector<16xf32> to vector<16x1xf32>
    %cst_70 = arith.constant dense<0.000000e+00> : vector<1xf32>
    %158 = vector.multi_reduction <add>, %157, %cst_70 [0] : vector<16x1xf32> to vector<1xf32>
    %159 = vector.shape_cast %158 : vector<1xf32> to vector<1x1xf32>
    %cst_71 = arith.constant 0.285714298 : f32
    %160 = vector.broadcast %cst_71 : f32 to vector<1x1xf32>
    %161 = arith.addf %159, %160 : vector<1x1xf32>
    %c0_72 = arith.constant 0 : index
    %c0_73 = arith.constant 0 : index
    %162 = vector.load %arg6[%c0_72, %c0_73] : memref<1x1xf32, #tpu.memory_space<vmem>>, vector<1x1xf32>
    tpu.vector_store %arg6[%c0_72, %c0_73], %161 {strides = array<i32>} : memref<1x1xf32, #tpu.memory_space<vmem>>, vector<1x1xf32>,
    return
  }
  func.func @transform_4(%arg0: i32) -> (i32, i32) {
    %c0_i32 = arith.constant 0 : i32
    %c0_i32_0 = arith.constant 0 : i32
    %c0_i32_1 = arith.constant 0 : i32
    return %c0_i32, %c0_i32_0 : i32, i32
  }
  func.func @transform_5(%arg0: i32) -> (i32, i32) {
    %c0_i32 = arith.constant 0 : i32
    %c0_i32_0 = arith.constant 0 : i32
    %c0_i32_1 = arith.constant 0 : i32
    return %c0_i32, %c0_i32_0 : i32, i32
  }
}

</mosaic_0001>

<llo_original>
// kernel: tpu_custom_call.1
$region0: #{tpu_custom_call.1}
  #allocation0 [shape = 'u32[]', space=smem, size = 0x4, offset = 0x4, fixed_abs, tag = 'smem constant byte address 0x4 - core index']
  #allocation1 [shape = 'u32[144,128]{1,0:T(1,128)}', space=vmem, size = 0x12000, scoped, tag = 'internal scratch']
  #allocation2 [shape = 'f32[16,256]{1,0:T(8,128)}', space=vmem, size = 0x4000, scoped, tag = 'scratch operand']
  #allocation3 [shape = 'f32[16,256]{1,0:T(8,128)}', space=vmem, size = 0x4000, scoped, tag = 'scratch operand']
  #allocation4 [shape = 's32[4]{0}', space=sflag, size = 0x10, scoped, tag = 'scratch operand']
  #allocation9 [shape = 's32[]', space=sflag, size = 0x4, offset = 0, fixed_abs, tag = 'sflag constant byte address 0x0 - dummy sync flag']
  #allocation10 [shape = 's32[]', space=sflag, size = 0x4, offset = 0, fixed_abs, tag = 'sflag constant byte address 0x0 - dummy sync flag']
  #allocation11 [shape = 'u32[]', space=smem, size = 0x4, offset = 0x44, fixed_abs, tag = 'smem constant byte address 0x44 - assertion arg 0']
  #allocation12 [shape = 'u32[]', space=smem, size = 0x4, offset = 0x48, fixed_abs, tag = 'smem constant byte address 0x48 - assertion arg 1']
  #allocation13 [shape = 's32[]', space=sflag, size = 0x4, offset = 0, fixed_abs, tag = 'sflag constant byte address 0x0 - dummy sync flag']
  #allocation14 [shape = 's32[]', space=sflag, size = 0x4, offset = 0, fixed_abs, tag = 'sflag constant byte address 0x0 - dummy sync flag']
  #allocation15 [shape = 's32[]', space=sflag, size = 0x4, offset = 0, fixed_abs, tag = 'sflag constant byte address 0x0 - dummy sync flag']
  #allocation16 [shape = 's32[]', space=sflag, size = 0x4, offset = 0, fixed_abs, tag = 'sflag constant byte address 0x0 - dummy sync flag']
  #allocation17 [shape = 's32[]', space=sflag, size = 0x4, offset = 0, fixed_abs, tag = 'sflag constant byte address 0x0 - dummy sync flag']
  #allocation18 [shape = 's32[]', space=sflag, size = 0x4, offset = 0, fixed_abs, tag = 'sflag constant byte address 0x0 - dummy sync flag']
  %s0 = inlined_call_operand.hbm [shape: f32[8,128], index: 0, kind: input, shape index: {}]
  %s1 = inlined_call_operand.hbm [shape: f32[8,256], index: 1, kind: input, shape index: {}]
  %s2 = inlined_call_operand.hbm [shape: f32[8,128], index: 2, kind: input, shape index: {}]
  %s3 = inlined_call_operand.hbm [shape: f32[8,256], index: 3, kind: input, shape index: {}]
  %s4 = inlined_call_operand.hbm [shape: f32[16,16], index: 4, kind: input, shape index: {}]
  %s5 = inlined_call_operand.hbm [shape: f32[1,1], index: 5, kind: output, shape index: {}]
  %s6 = sld [smem:[#allocation0]]
  $region34: #{tpu_custom_call.1} parent=0
    _
  %s8 = ssub.s32 1, %s6
  %s9 = scalar_select 0, %s8, %s6
  $region1: #{tpu_custom_call.1} parent=0
    #allocation5 [shape = 'u8[8192]{0}', space=vmem, size = 0x2000, scoped, tag = 'input window, operand 4, single buffered']
    #allocation6 [shape = 's32[1]{0}', space=sflag, size = 0x4, scoped, tag = 'scoped memory for tpu_custom_call.1']
    #allocation7 [shape = 's32[1]{0}', space=sflag, size = 0x4, scoped, tag = 'scoped memory for tpu_custom_call.1']
    #allocation8 [shape = 'u8[512]{0}', space=vmem, size = 0x400, scoped, tag = 'output window, operand 0, single buffered']
    %10 = vsyncpa [#allocation6], 0
    %11 = vsyncpa [#allocation7], 0
    // Predicated region
    $region2: #{tpu_custom_call.1} parent=1 // pred_check
      _
    $region3: #{tpu_custom_call.1} parent=1 // pred_check_branch
      %13 = sbr.rel (0) target = $region5
    $region4: #{tpu_custom_call.1} parent=1 // pred_region
      %s15 = ssub.s32 256, 256
      %16 = vsyncadd [#allocation6], %s15
      %s17 = sshll.u32 [#allocation5], 4
      %s18 = int_to_ptr.vmem [resolvable:$true] %s17
      %23 = dma.hbm_to_vmem [thread:$0]  %s4, 256, %s18, [#allocation6], 128, 128, 8
    $region5: #{tpu_custom_call.1} parent=1 // pred_fallthru
      _
    // Predicated region
    $region6: #{tpu_custom_call.1} parent=1 // pred_check
      _
    $region7: #{tpu_custom_call.1} parent=1 // pred_check_branch
      %25 = sbr.rel (0) target = $region9
    $region8: #{tpu_custom_call.1} parent=1 // pred_region
      %26 = dma.done [#allocation6], 256
    $region9: #{tpu_custom_call.1} parent=1 // pred_fallthru
      _
    // Predicated region
    $region10: #{tpu_custom_call.1} parent=1 // pred_check
      _
    $region11: #{tpu_custom_call.1} parent=1 // pred_check_branch
      %29 = sbr.rel target = $region13
    $region12: #{tpu_custom_call.1} parent=1 // pred_region
      %30 = sst [smem:[#allocation11]] [#allocation10]
      %31 = sst [smem:[#allocation12]] [#allocation9]
    $region13: #{tpu_custom_call.1} parent=1 // pred_fallthru
      _
    %33 = shalt.err (0)
    %s35 = sshll.u32 [#allocation2], 4
    %s36 = int_to_ptr.vmem [resolvable:$true] %s35
    %38 = dma.hbm_to_vmem [thread:$0]  %s0, 128, %s36, [#allocation4]
    %s39 = scalar_lea.vmem [#allocation2], 16
    %s40 = scalar_lea.sflag [#allocation4], 1
    // Predicated region
    $region14: #{tpu_custom_call.1} parent=1 // pred_check
      _
    $region15: #{tpu_custom_call.1} parent=1 // pred_check_branch
      %42 = sbr.rel target = $region17
    $region16: #{tpu_custom_call.1} parent=1 // pred_region
      %43 = sst [smem:[#allocation11]] [#allocation14]
      %44 = sst [smem:[#allocation12]] [#allocation13]
    $region17: #{tpu_custom_call.1} parent=1 // pred_fallthru
      _
    %46 = shalt.err (0)
    %s48 = sshll.u32 %s39, 4
    %s49 = int_to_ptr.vmem [resolvable:$true] %s48
    %51 = dma.hbm_to_vmem [thread:$0]  %s2, 128, %s49, %s40
    %v52 = vlaneseq
    %v53 = vshrl.u32 %v52, 7
    %v54 = vadd.s32 %v53, 8
    %v55 = vlaneseq
    %v56 = vand.u32 %v55, 127
    %vm57 = vcmp.eq.s32.totalorder %v53, %v56
    %vm58 = vcmp.eq.s32.totalorder %v54, %v56
    %s59 = smul.u32 8, 1
    %s60 = smul.u32 %s59, 1
    %s61 = sshll.u32 %s60, 4
    %62 = dma.done [#allocation4], %s61
    %s63 = sshll.u32 %s60, 4
    %64 = dma.done %s40, %s63
    %s65 = scalar_lea.sflag [#allocation4], 2
    // Predicated region
    $region18: #{tpu_custom_call.1} parent=1 // pred_check
      _
    $region19: #{tpu_custom_call.1} parent=1 // pred_check_branch
      %67 = sbr.rel target = $region21
    $region20: #{tpu_custom_call.1} parent=1 // pred_region
      %68 = sst [smem:[#allocation11]] [#allocation16]
      %69 = sst [smem:[#allocation12]] [#allocation15]
    $region21: #{tpu_custom_call.1} parent=1 // pred_fallthru
      _
    %71 = shalt.err (0)
    %s73 = sshll.u32 [#allocation3], 4
    %s74 = int_to_ptr.vmem [resolvable:$true] %s73
    %76 = dma.hbm_to_vmem [thread:$0]  %s1, 256, %s74, %s65
    %s77 = scalar_lea.vmem [#allocation3], 16
    %s78 = scalar_lea.sflag [#allocation4], 3
    // Predicated region
    $region22: #{tpu_custom_call.1} parent=1 // pred_check
      _
    $region23: #{tpu_custom_call.1} parent=1 // pred_check_branch
      %80 = sbr.rel target = $region25
    $region24: #{tpu_custom_call.1} parent=1 // pred_region
      %81 = sst [smem:[#allocation11]] [#allocation18]
      %82 = sst [smem:[#allocation12]] [#allocation17]
    $region25: #{tpu_custom_call.1} parent=1 // pred_fallthru
      _
    %84 = shalt.err (0)
    %s86 = sshll.u32 %s77, 4
    %s87 = int_to_ptr.vmem [resolvable:$true] %s86
    %89 = dma.hbm_to_vmem [thread:$0]  %s3, 256, %s87, %s78
    %v90 = vld [vmem:[#allocation2] sm:$0xff]
    %v91 = vld [vmem:[#allocation2 + $0x10] sm:$0xff]
    %v92 = vpack.c.bf16 %v91, %v90
    %v93 = vunpack.c.l.bf16 %v92
    %v94 = vunpack.c.h.bf16 %v92
    %v95 = vsub.f32 %v90, %v93
    %v96 = vsub.f32 %v91, %v94
    %v97 = vpack.c.bf16 %v96, %v95
    %98 = vmatprep.subr.bf16.mxu0 0
    %99 = vmatpush1.bf16.xpose.msra.mxu0 %v97
    %100 = vmatprep.subr.bf16.mxu0 0
    %101 = vmatpush1.bf16.xpose.msra.mxu0 0
    %102 = vmatprep.subr.bf16.mxu0 0
    %103 = vmatpush1.bf16.xpose.msra.mxu0 0
    %104 = vmatprep.subr.bf16.mxu0 0
    %105 = vmatpush1.bf16.xpose.msra.mxu0 0
    %106 = vmatprep.subr.bf16.mxu0 0
    %107 = vmatpush1.bf16.xpose.msra.mxu0 0
    %108 = vmatprep.subr.bf16.mxu0 0
    %109 = vmatpush1.bf16.xpose.msra.mxu0 0
    %110 = vmatprep.subr.bf16.mxu0 0
    %111 = vmatpush1.bf16.xpose.msra.mxu0 0
    %112 = vmatprep.subr.bf16.mxu0 0
    %113 = vmatpush1.bf16.xpose.msra.mxu0 0
    %114 = vmatprep.subr.bf16.mxu0 0
    %115 = vmatpush1.bf16.xpose.msra.mxu0 0
    %116 = vmatprep.subr.bf16.mxu0 0
    %117 = vmatpush1.bf16.xpose.msra.mxu0 0
    %118 = vmatprep.subr.bf16.mxu0 0
    %119 = vmatpush1.bf16.xpose.msra.mxu0 0
    %120 = vmatprep.subr.bf16.mxu0 0
    %121 = vmatpush1.bf16.xpose.msra.mxu0 0
    %122 = vmatprep.subr.bf16.mxu0 0
    %123 = vmatpush1.bf16.xpose.msra.mxu0 0
    %124 = vmatprep.subr.bf16.mxu0 0
    %125 = vmatpush1.bf16.xpose.msra.mxu0 0
    %126 = vmatprep.subr.bf16.mxu0 0
    %127 = vmatpush1.bf16.xpose.msra.mxu0 0
    %128 = vmatprep.subr.bf16.mxu0 0
    %129 = vmatpush1.bf16.xpose.msra.mxu0 0
    %130 = vmatprep.mubr.bf16.mxu0 0
    %131 = vmatmul.mubr.bf16.gmra.mrb[0].mxu0 %v92
    %v132 = vpop.f32.mrb[0].mxu0
    %v133 = vadd.f32 0.0, %v132
    %v134 = vpop.f32.mrb[0].mxu0
    %v135 = vpop.f32.mrb[0].mxu0
    %v136 = vadd.f32 0.0, %v135
    %v137 = vpop.f32.mrb[0].mxu0
    %138 = vdwg.mxu0
    %139 = vmatprep.subr.bf16.mxu0 0
    %140 = vmatpush1.bf16.xpose.msra.mxu0 %v92
    %141 = vmatprep.subr.bf16.mxu0 0
    %142 = vmatpush1.bf16.xpose.msra.mxu0 0
    %143 = vmatprep.subr.bf16.mxu0 0
    %144 = vmatpush1.bf16.xpose.msra.mxu0 0
    %145 = vmatprep.subr.bf16.mxu0 0
    %146 = vmatpush1.bf16.xpose.msra.mxu0 0
    %147 = vmatprep.subr.bf16.mxu0 0
    %148 = vmatpush1.bf16.xpose.msra.mxu0 0
    %149 = vmatprep.subr.bf16.mxu0 0
    %150 = vmatpush1.bf16.xpose.msra.mxu0 0
    %151 = vmatprep.subr.bf16.mxu0 0
    %152 = vmatpush1.bf16.xpose.msra.mxu0 0
    %153 = vmatprep.subr.bf16.mxu0 0
    %154 = vmatpush1.bf16.xpose.msra.mxu0 0
    %155 = vmatprep.subr.bf16.mxu0 0
    %156 = vmatpush1.bf16.xpose.msra.mxu0 0
    %157 = vmatprep.subr.bf16.mxu0 0
    %158 = vmatpush1.bf16.xpose.msra.mxu0 0
    %159 = vmatprep.subr.bf16.mxu0 0
    %160 = vmatpush1.bf16.xpose.msra.mxu0 0
    %161 = vmatprep.subr.bf16.mxu0 0
    %162 = vmatpush1.bf16.xpose.msra.mxu0 0
    %163 = vmatprep.subr.bf16.mxu0 0
    %164 = vmatpush1.bf16.xpose.msra.mxu0 0
    %165 = vmatprep.subr.bf16.mxu0 0
    %166 = vmatpush1.bf16.xpose.msra.mxu0 0
    %167 = vmatprep.subr.bf16.mxu0 0
    %168 = vmatpush1.bf16.xpose.msra.mxu0 0
    %169 = vmatprep.subr.bf16.mxu0 0
    %170 = vmatpush1.bf16.xpose.msra.mxu0 0
    %171 = vmatprep.mubr.bf16.mxu0 0
    %172 = vmatmul.mubr.bf16.gmra.mrb[0].mxu0 %v92
    %v173 = vpop.f32.mrb[0].mxu0
    %v174 = vadd.f32 %v133, %v173
    %v175 = vpop.f32.mrb[0].mxu0
    %v176 = vpop.f32.mrb[0].mxu0
    %v177 = vadd.f32 %v136, %v176
    %v178 = vpop.f32.mrb[0].mxu0
    %179 = vdwg.mxu0
    %180 = vmatprep.subr.bf16.mxu0 0
    %181 = vmatpush1.bf16.xpose.msra.mxu0 %v92
    %182 = vmatprep.subr.bf16.mxu0 0
    %183 = vmatpush1.bf16.xpose.msra.mxu0 0
    %184 = vmatprep.subr.bf16.mxu0 0
    %185 = vmatpush1.bf16.xpose.msra.mxu0 0
    %186 = vmatprep.subr.bf16.mxu0 0
    %187 = vmatpush1.bf16.xpose.msra.mxu0 0
    %188 = vmatprep.subr.bf16.mxu0 0
    %189 = vmatpush1.bf16.xpose.msra.mxu0 0
    %190 = vmatprep.subr.bf16.mxu0 0
    %191 = vmatpush1.bf16.xpose.msra.mxu0 0
    %192 = vmatprep.subr.bf16.mxu0 0
    %193 = vmatpush1.bf16.xpose.msra.mxu0 0
    %194 = vmatprep.subr.bf16.mxu0 0
    %195 = vmatpush1.bf16.xpose.msra.mxu0 0
    %196 = vmatprep.subr.bf16.mxu0 0
    %197 = vmatpush1.bf16.xpose.msra.mxu0 0
    %198 = vmatprep.subr.bf16.mxu0 0
    %199 = vmatpush1.bf16.xpose.msra.mxu0 0
    %200 = vmatprep.subr.bf16.mxu0 0
    %201 = vmatpush1.bf16.xpose.msra.mxu0 0
    %202 = vmatprep.subr.bf16.mxu0 0
    %203 = vmatpush1.bf16.xpose.msra.mxu0 0
    %204 = vmatprep.subr.bf16.mxu0 0
    %205 = vmatpush1.bf16.xpose.msra.mxu0 0
    %206 = vmatprep.subr.bf16.mxu0 0
    %207 = vmatpush1.bf16.xpose.msra.mxu0 0
    %208 = vmatprep.subr.bf16.mxu0 0
    %209 = vmatpush1.bf16.xpose.msra.mxu0 0
    %210 = vmatprep.subr.bf16.mxu0 0
    %211 = vmatpush1.bf16.xpose.msra.mxu0 0
    %212 = vmatprep.mubr.bf16.mxu0 0
    %213 = vmatmul.mubr.bf16.gmra.mrb[0].mxu0 %v97
    %v214 = vpop.f32.mrb[0].mxu0
    %v215 = vadd.f32 0.0, %v214
    %v216 = vpop.f32.mrb[0].mxu0
    %v217 = vpop.f32.mrb[0].mxu0
    %v218 = vadd.f32 0.0, %v217
    %v219 = vpop.f32.mrb[0].mxu0
    %220 = vdwg.mxu0
    %v221 = vadd.f32 %v174, %v215
    %v222 = vadd.f32 %v177, %v218
    %v223 = vsel %vm57, %v221, 0.0
    %v224 = vsel %vm58, %v222, 0.0
    %vm225 = vcmask 130048
    %v226 = vsel %vm225, %v223, 0.0
    %v227 = vsel %vm225, %v224, 0.0
    %v228 = vadd.f32 %v226, %v227
    %v229 = vrot.slane %v228, 4
    %v230 = vadd.f32 %v228, %v229
    %v231 = vrot.slane %v230, 2
    %v232 = vadd.f32 %v230, %v231
    %v233 = vrot.slane %v232, 1
    %v234 = vadd.f32 %v232, %v233
    %235 = vadd.xlane.f32.xlu0 %v226
    %v236 = vpop.xlane.xlu0 %235
    %237 = vadd.xlane.f32.xlu0 %v227
    %v238 = vpop.xlane.xlu0 %237
    %v239 = vadd.f32 %v236, %v234
    %v240 = vadd.f32 %v238, %v234
    %v241 = vmul.f32 %v221, 2.0
    %v242 = vmul.f32 %v222, 2.0
    %v243 = vsub.f32 %v239, %v241
    %v244 = vsub.f32 %v240, %v242
    %v245 = vmax.f32 %v243, 0.0
    %v246 = vmax.f32 %v244, 0.0
    %v247 = vsel %vm225, %v245, 0.0
    %248 = vadd.xlane.f32.xlu0 %v247
    %v249 = vpop.xlane.xlu0 %248
    %v250 = vsel %vm225, %v246, 0.0
    %251 = vadd.xlane.f32.xlu0 %v250
    %v252 = vpop.xlane.xlu0 %251
    %v253 = vadd.f32 %v249, %v252
    %v254 = vrot.slane %v253, 4
    %v255 = vadd.f32 %v253, %v254
    %v256 = vrot.slane %v255, 2
    %v257 = vadd.f32 %v255, %v256
    %v258 = vrot.slane %v257, 1
    %v259 = vadd.f32 %v257, %v258
    %v260 = vmul.f32 %v259, 0.0010416667
    %v261 = vmax.f32 %v260, 1e-30
    %v262 = vrcp.pop %v261
    %v263 = vmul.f32 1.0, %v262
    %v264 = vmul.f32 %v263, -1.0
    %v265 = vmul.f32 %v245, %v264
    %v266 = vmul.f32 %v246, %v264
    %v267 = vmul.f32 %v265, 1.442695
    %v268 = vpow.pop %v267
    %v269 = vmul.f32 %v266, 1.442695
    %v270 = vpow.pop %v269
    %v271 = vmul.f32 %v263, -0.5
    %v272 = vmul.f32 %v245, %v271
    %v273 = vmul.f32 %v246, %v271
    %v274 = vmul.f32 %v272, 1.442695
    %v275 = vpow.pop %v274
    %v276 = vmul.f32 %v273, 1.442695
    %v277 = vpow.pop %v276
    %v278 = vadd.f32 %v268, %v275
    %v279 = vadd.f32 %v270, %v277
    %v280 = vmul.f32 %v263, -0.25
    %v281 = vmul.f32 %v245, %v280
    %v282 = vmul.f32 %v246, %v280
    %v283 = vmul.f32 %v281, 1.442695
    %v284 = vpow.pop %v283
    %v285 = vmul.f32 %v282, 1.442695
    %v286 = vpow.pop %v285
    %v287 = vadd.f32 %v278, %v284
    %v288 = vadd.f32 %v279, %v286
    %v289 = vmul.f32 %v263, -0.125
    %v290 = vmul.f32 %v245, %v289
    %v291 = vmul.f32 %v246, %v289
    %v292 = vmul.f32 %v290, 1.442695
    %v293 = vpow.pop %v292
    %v294 = vmul.f32 %v291, 1.442695
    %v295 = vpow.pop %v294
    %v296 = vadd.f32 %v287, %v293
    %v297 = vadd.f32 %v288, %v295
    %v298 = vmul.f32 %v263, -0.0625
    %v299 = vmul.f32 %v245, %v298
    %v300 = vmul.f32 %v246, %v298
    %v301 = vmul.f32 %v299, 1.442695
    %v302 = vpow.pop %v301
    %v303 = vmul.f32 %v300, 1.442695
    %v304 = vpow.pop %v303
    %v305 = vadd.f32 %v296, %v302
    %v306 = vadd.f32 %v297, %v304
    %s307 = smul.u32 %s59, 2
    %s308 = sshll.u32 %s307, 4
    %309 = dma.done %s65, %s308
    %s310 = sshll.u32 %s307, 4
    %311 = dma.done %s78, %s310
    %v312 = vld [vmem:[#allocation3] sm:$0xff]
    %v313 = vld [vmem:[#allocation3 + $0x8] sm:$0xff]
    %v314 = vld [vmem:[#allocation3 + $0x10] sm:$0xff]
    %v315 = vld [vmem:[#allocation3 + $0x18] sm:$0xff]
    %v316 = vpack.c.bf16 %v314, %v312
    %v317 = vpack.c.bf16 %v315, %v313
    %v318 = vunpack.c.l.bf16 %v316
    %v319 = vunpack.c.l.bf16 %v317
    %v320 = vunpack.c.h.bf16 %v316
    %v321 = vunpack.c.h.bf16 %v317
    %v322 = vsub.f32 %v312, %v318
    %v323 = vsub.f32 %v313, %v319
    %v324 = vsub.f32 %v314, %v320
    %v325 = vsub.f32 %v315, %v321
    %v326 = vpack.c.bf16 %v324, %v322
    %v327 = vpack.c.bf16 %v325, %v323
    %328 = vmatprep.subr.bf16.mxu0 %v327
    %329 = vmatpush1.bf16.xpose.msra.mxu0 %v326
    %330 = vmatprep.subr.bf16.mxu0 0
    %331 = vmatpush1.bf16.xpose.msra.mxu0 0
    %332 = vmatprep.subr.bf16.mxu0 0
    %333 = vmatpush1.bf16.xpose.msra.mxu0 0
    %334 = vmatprep.subr.bf16.mxu0 0
    %335 = vmatpush1.bf16.xpose.msra.mxu0 0
    %336 = vmatprep.subr.bf16.mxu0 0
    %337 = vmatpush1.bf16.xpose.msra.mxu0 0
    %338 = vmatprep.subr.bf16.mxu0 0
    %339 = vmatpush1.bf16.xpose.msra.mxu0 0
    %340 = vmatprep.subr.bf16.mxu0 0
    %341 = vmatpush1.bf16.xpose.msra.mxu0 0
    %342 = vmatprep.subr.bf16.mxu0 0
    %343 = vmatpush1.bf16.xpose.msra.mxu0 0
    %344 = vmatprep.subr.bf16.mxu0 0
    %345 = vmatpush1.bf16.xpose.msra.mxu0 0
    %346 = vmatprep.subr.bf16.mxu0 0
    %347 = vmatpush1.bf16.xpose.msra.mxu0 0
    %348 = vmatprep.subr.bf16.mxu0 0
    %349 = vmatpush1.bf16.xpose.msra.mxu0 0
    %350 = vmatprep.subr.bf16.mxu0 0
    %351 = vmatpush1.bf16.xpose.msra.mxu0 0
    %352 = vmatprep.subr.bf16.mxu0 0
    %353 = vmatpush1.bf16.xpose.msra.mxu0 0
    %354 = vmatprep.subr.bf16.mxu0 0
    %355 = vmatpush1.bf16.xpose.msra.mxu0 0
    %356 = vmatprep.subr.bf16.mxu0 0
    %357 = vmatpush1.bf16.xpose.msra.mxu0 0
    %358 = vmatprep.subr.bf16.mxu0 0
    %359 = vmatpush1.bf16.xpose.msra.mxu0 0
    %360 = vmatprep.mubr.bf16.mxu0 %v317
    %361 = vmatmul.mubr.bf16.gmra.mrb[0].mxu0 %v316
    %v362 = vpop.f32.mrb[0].mxu0
    %v363 = vadd.f32 0.0, %v362
    %v364 = vpop.f32.mrb[0].mxu0
    %v365 = vpop.f32.mrb[0].mxu0
    %v366 = vadd.f32 0.0, %v365
    %v367 = vpop.f32.mrb[0].mxu0
    %368 = vdwg.mxu0
    %369 = vmatprep.subr.bf16.mxu0 %v317
    %370 = vmatpush1.bf16.xpose.msra.mxu0 %v316
    %371 = vmatprep.subr.bf16.mxu0 0
    %372 = vmatpush1.bf16.xpose.msra.mxu0 0
    %373 = vmatprep.subr.bf16.mxu0 0
    %374 = vmatpush1.bf16.xpose.msra.mxu0 0
    %375 = vmatprep.subr.bf16.mxu0 0
    %376 = vmatpush1.bf16.xpose.msra.mxu0 0
    %377 = vmatprep.subr.bf16.mxu0 0
    %378 = vmatpush1.bf16.xpose.msra.mxu0 0
    %379 = vmatprep.subr.bf16.mxu0 0
    %380 = vmatpush1.bf16.xpose.msra.mxu0 0
    %381 = vmatprep.subr.bf16.mxu0 0
    %382 = vmatpush1.bf16.xpose.msra.mxu0 0
    %383 = vmatprep.subr.bf16.mxu0 0
    %384 = vmatpush1.bf16.xpose.msra.mxu0 0
    %385 = vmatprep.subr.bf16.mxu0 0
    %386 = vmatpush1.bf16.xpose.msra.mxu0 0
    %387 = vmatprep.subr.bf16.mxu0 0
    %388 = vmatpush1.bf16.xpose.msra.mxu0 0
    %389 = vmatprep.subr.bf16.mxu0 0
    %390 = vmatpush1.bf16.xpose.msra.mxu0 0
    %391 = vmatprep.subr.bf16.mxu0 0
    %392 = vmatpush1.bf16.xpose.msra.mxu0 0
    %393 = vmatprep.subr.bf16.mxu0 0
    %394 = vmatpush1.bf16.xpose.msra.mxu0 0
    %395 = vmatprep.subr.bf16.mxu0 0
    %396 = vmatpush1.bf16.xpose.msra.mxu0 0
    %397 = vmatprep.subr.bf16.mxu0 0
    %398 = vmatpush1.bf16.xpose.msra.mxu0 0
    %399 = vmatprep.subr.bf16.mxu0 0
    %400 = vmatpush1.bf16.xpose.msra.mxu0 0
    %401 = vmatprep.mubr.bf16.mxu0 %v317
    %402 = vmatmul.mubr.bf16.gmra.mrb[0].mxu0 %v316
    %v403 = vpop.f32.mrb[0].mxu0
    %v404 = vadd.f32 %v363, %v403
    %v405 = vpop.f32.mrb[0].mxu0
    %v406 = vpop.f32.mrb[0].mxu0
    %v407 = vadd.f32 %v366, %v406
    %v408 = vpop.f32.mrb[0].mxu0
    %409 = vdwg.mxu0
    %410 = vmatprep.subr.bf16.mxu0 %v317
    %411 = vmatpush1.bf16.xpose.msra.mxu0 %v316
    %412 = vmatprep.subr.bf16.mxu0 0
    %413 = vmatpush1.bf16.xpose.msra.mxu0 0
    %414 = vmatprep.subr.bf16.mxu0 0
    %415 = vmatpush1.bf16.xpose.msra.mxu0 0
    %416 = vmatprep.subr.bf16.mxu0 0
    %417 = vmatpush1.bf16.xpose.msra.mxu0 0
    %418 = vmatprep.subr.bf16.mxu0 0
    %419 = vmatpush1.bf16.xpose.msra.mxu0 0
    %420 = vmatprep.subr.bf16.mxu0 0
    %421 = vmatpush1.bf16.xpose.msra.mxu0 0
    %422 = vmatprep.subr.bf16.mxu0 0
    %423 = vmatpush1.bf16.xpose.msra.mxu0 0
    %424 = vmatprep.subr.bf16.mxu0 0
    %425 = vmatpush1.bf16.xpose.msra.mxu0 0
    %426 = vmatprep.subr.bf16.mxu0 0
    %427 = vmatpush1.bf16.xpose.msra.mxu0 0
    %428 = vmatprep.subr.bf16.mxu0 0
    %429 = vmatpush1.bf16.xpose.msra.mxu0 0
    %430 = vmatprep.subr.bf16.mxu0 0
    %431 = vmatpush1.bf16.xpose.msra.mxu0 0
    %432 = vmatprep.subr.bf16.mxu0 0
    %433 = vmatpush1.bf16.xpose.msra.mxu0 0
    %434 = vmatprep.subr.bf16.mxu0 0
    %435 = vmatpush1.bf16.xpose.msra.mxu0 0
    %436 = vmatprep.subr.bf16.mxu0 0
    %437 = vmatpush1.bf16.xpose.msra.mxu0 0
    %438 = vmatprep.subr.bf16.mxu0 0
    %439 = vmatpush1.bf16.xpose.msra.mxu0 0
    %440 = vmatprep.subr.bf16.mxu0 0
    %441 = vmatpush1.bf16.xpose.msra.mxu0 0
    %442 = vmatprep.mubr.bf16.mxu0 %v327
    %443 = vmatmul.mubr.bf16.gmra.mrb[0].mxu0 %v326
    %v444 = vpop.f32.mrb[0].mxu0
    %v445 = vadd.f32 0.0, %v444
    %v446 = vpop.f32.mrb[0].mxu0
    %v447 = vpop.f32.mrb[0].mxu0
    %v448 = vadd.f32 0.0, %v447
    %v449 = vpop.f32.mrb[0].mxu0
    %450 = vdwg.mxu0
    %v451 = vadd.f32 %v404, %v445
    %v452 = vadd.f32 %v407, %v448
    %v453 = vsel %vm57, %v451, 0.0
    %v454 = vsel %vm58, %v452, 0.0
    %v455 = vsel %vm225, %v453, 0.0
    %v456 = vsel %vm225, %v454, 0.0
    %v457 = vadd.f32 %v455, %v456
    %v458 = vrot.slane %v457, 4
    %v459 = vadd.f32 %v457, %v458
    %v460 = vrot.slane %v459, 2
    %v461 = vadd.f32 %v459, %v460
    %v462 = vrot.slane %v461, 1
    %v463 = vadd.f32 %v461, %v462
    %464 = vadd.xlane.f32.xlu0 %v455
    %v465 = vpop.xlane.xlu0 %464
    %466 = vadd.xlane.f32.xlu0 %v456
    %v467 = vpop.xlane.xlu0 %466
    %v468 = vadd.f32 %v465, %v463
    %v469 = vadd.f32 %v467, %v463
    %v470 = vmul.f32 %v451, 2.0
    %v471 = vmul.f32 %v452, 2.0
    %v472 = vsub.f32 %v468, %v470
    %v473 = vsub.f32 %v469, %v471
    %v474 = vmax.f32 %v472, 0.0
    %v475 = vmax.f32 %v473, 0.0
    %v476 = vsel %vm225, %v474, 0.0
    %477 = vadd.xlane.f32.xlu0 %v476
    %v478 = vpop.xlane.xlu0 %477
    %v479 = vsel %vm225, %v475, 0.0
    %480 = vadd.xlane.f32.xlu0 %v479
    %v481 = vpop.xlane.xlu0 %480
    %v482 = vadd.f32 %v478, %v481
    %v483 = vrot.slane %v482, 4
    %v484 = vadd.f32 %v482, %v483
    %v485 = vrot.slane %v484, 2
    %v486 = vadd.f32 %v484, %v485
    %v487 = vrot.slane %v486, 1
    %v488 = vadd.f32 %v486, %v487
    %v489 = vmul.f32 %v488, 0.0010416667
    %v490 = vmax.f32 %v489, 1e-30
    %v491 = vrcp.pop %v490
    %v492 = vmul.f32 1.0, %v491
    %v493 = vmul.f32 %v492, -1.0
    %v494 = vmul.f32 %v474, %v493
    %v495 = vmul.f32 %v475, %v493
    %v496 = vmul.f32 %v494, 1.442695
    %v497 = vpow.pop %v496
    %v498 = vmul.f32 %v495, 1.442695
    %v499 = vpow.pop %v498
    %v500 = vmul.f32 %v492, -0.5
    %v501 = vmul.f32 %v474, %v500
    %v502 = vmul.f32 %v475, %v500
    %v503 = vmul.f32 %v501, 1.442695
    %v504 = vpow.pop %v503
    %v505 = vmul.f32 %v502, 1.442695
    %v506 = vpow.pop %v505
    %v507 = vadd.f32 %v497, %v504
    %v508 = vadd.f32 %v499, %v506
    %v509 = vmul.f32 %v492, -0.25
    %v510 = vmul.f32 %v474, %v509
    %v511 = vmul.f32 %v475, %v509
    %v512 = vmul.f32 %v510, 1.442695
    %v513 = vpow.pop %v512
    %v514 = vmul.f32 %v511, 1.442695
    %v515 = vpow.pop %v514
    %v516 = vadd.f32 %v507, %v513
    %v517 = vadd.f32 %v508, %v515
    %v518 = vmul.f32 %v492, -0.125
    %v519 = vmul.f32 %v474, %v518
    %v520 = vmul.f32 %v475, %v518
    %v521 = vmul.f32 %v519, 1.442695
    %v522 = vpow.pop %v521
    %v523 = vmul.f32 %v520, 1.442695
    %v524 = vpow.pop %v523
    %v525 = vadd.f32 %v516, %v522
    %v526 = vadd.f32 %v517, %v524
    %v527 = vmul.f32 %v492, -0.0625
    %v528 = vmul.f32 %v474, %v527
    %v529 = vmul.f32 %v475, %v527
    %v530 = vmul.f32 %v528, 1.442695
    %v531 = vpow.pop %v530
    %v532 = vmul.f32 %v529, 1.442695
    %v533 = vpow.pop %v532
    %v534 = vadd.f32 %v525, %v531
    %v535 = vadd.f32 %v526, %v533
    %v536 = vmul.f32 %v305, %v534
    %v537 = vmul.f32 %v306, %v535
    %v538 = vld [vmem:[#allocation5] sm:$0xff]
    %v539 = vld [vmem:[#allocation5 + $0x8] sm:$0xff]
    %v540 = vmul.f32 %v536, %v538
    %v541 = vmul.f32 %v537, %v539
    %v542 = vsel %vm225, %v540, 0.0
    %543 = vadd.xlane.f32.xlu0 %v542
    %v544 = vpop.xlane.xlu0 %543
    %v545 = vsel %vm225, %v541, 0.0
    %546 = vadd.xlane.f32.xlu0 %v545
    %v547 = vpop.xlane.xlu0 %546
    %v548 = vadd.f32 %v544, %v547
    %v549 = vrot.slane %v548, 4
    %v550 = vadd.f32 %v548, %v549
    %v551 = vrot.slane %v550, 2
    %v552 = vadd.f32 %v550, %v551
    %v553 = vrot.slane %v552, 1
    %v554 = vadd.f32 %v552, %v553
    %v555 = vadd.f32 %v554, 0.2857143
    %vm556 = vcmask 0
    %557 = vst.msk [vmem:[#allocation8] sm:$0x1] %vm556, %v555
    // Predicated region
    $region26: #{tpu_custom_call.1} parent=1 // pred_check
      _
    $region27: #{tpu_custom_call.1} parent=1 // pred_check_branch
      %559 = sbr.rel (0) target = $region29
    $region28: #{tpu_custom_call.1} parent=1 // pred_region
      %s561 = ssub.s32 16, 16
      %562 = vsyncadd [#allocation7], %s561
      %s564 = sshll.u32 [#allocation8], 4
      %s565 = int_to_ptr.vmem [resolvable:$true] %s564
      %567 = dma.vmem_to_hbm [thread:$0]  %s565, 16, %s5, [#allocation7]
    $region29: #{tpu_custom_call.1} parent=1 // pred_fallthru
      _
    // Predicated region
    $region30: #{tpu_custom_call.1} parent=1 // pred_check
      _
    $region31: #{tpu_custom_call.1} parent=1 // pred_check_branch
      %569 = sbr.rel (0) target = $region33
    $region32: #{tpu_custom_call.1} parent=1 // pred_region
      %570 = dma.done [#allocation7], 16
    $region33: #{tpu_custom_call.1} parent=1 // pred_fallthru
      _
    %571 = vsyncpa [#allocation6], 1
    %572 = vsyncpa [#allocation7], 1
  %573 = vsyncmov [#allocation4]
  %s574 = vpop.sfrf %573
  %p575 = scmp.eq.s32.totalorder %s574, 0
  %p576 = pneg %p575
  %578 = shalt.err (%p576)
  %s579 = scalar_lea.sflag [#allocation4], 1
  %580 = vsyncmov %s579
  %s581 = vpop.sfrf %580
  %p582 = scmp.eq.s32.totalorder %s581, 0
  %p583 = pneg %p582
  %585 = shalt.err (%p583)
  %s586 = scalar_lea.sflag [#allocation4], 2
  %587 = vsyncmov %s586
  %s588 = vpop.sfrf %587
  %p589 = scmp.eq.s32.totalorder %s588, 0
  %p590 = pneg %p589
  %592 = shalt.err (%p590)
  %s593 = scalar_lea.sflag [#allocation4], 3
  %594 = vsyncmov %s593
  %s595 = vpop.sfrf %594
  %p596 = scmp.eq.s32.totalorder %s595, 0
  %p597 = pneg %p596
  %599 = shalt.err (%p597)

</llo_original>
